<compile_context>
chip_gen: v7x
topology: tpu7x:2x2x1
jax: 0.10.0
libtpu: 0.0.40
codegen_flags: <defaults>
</compile_context>

<pallas_src>
import functools

import jax
import jax.numpy as jnp
from jax.experimental import pallas as pl
from jax.experimental.pallas import tpu as pltpu


def build_attention_vec(class_num: int, stimulus_type: str = "12") -> jnp.ndarray:
    """Replicates CELoss_Marginal_Smooth.attention_lst (row value depends only on i)."""
    if stimulus_type == "4":
        rows, cols = 2, 2
    else:  # '12'
        rows, cols = 3, 4
    attn = []
    for i in range(class_num):
        r, c = i // cols, i % cols
        cnt = (
            int(0 <= r - 1 <= rows - 1)
            + int(0 <= r + 1 <= rows - 1)
            + int(0 <= c - 1 <= cols - 1)
            + int(0 <= c + 1 <= cols - 1)
            + int(0 <= r - 1 <= rows - 1 and 0 <= c - 1 <= cols - 1)
            + int(0 <= r - 1 <= rows - 1 and 0 <= c + 1 <= cols - 1)
            + int(0 <= r + 1 <= rows - 1 and 0 <= c - 1 <= cols - 1)
            + int(0 <= r + 1 <= rows - 1 and 0 <= c + 1 <= cols - 1)
        )
        attn.append(1.0 / cnt)
    return jnp.asarray(attn, dtype=jnp.float32)  # (class_num,)


def _celoss_marginal_smooth_kernel(x_ref, tgt_ref, beta_ref, out_ref, *, batch, tile_b):
    t = pl.program_id(0)

    # Natural-layout tile (TB, C); relayout in-kernel to lane-dense (C, TB):
    # classes on sublanes (12 -> 16 padded), batch samples on the 128 lanes.
    # The XLU transpose overlaps with the pipeline's DMA of the next tile.
    x = jnp.transpose(x_ref[...]).astype(jnp.float32)            # (C, TB)
    tgt = tgt_ref[...]                                           # (1, TB) int32
    beta = beta_ref[...]                                         # (1, TB) f32
    C, TB = x.shape

    # Column mask for the ragged last tile; zero padded columns up front so no
    # uninitialized lane data ever reaches exp/log.
    col = jax.lax.broadcasted_iota(jnp.int32, (1, TB), 1)
    valid = (t * tile_b + col) < batch                           # (1, TB) bool
    x = jnp.where(valid, x, 0.0)

    # Numerically stable log-softmax pieces along the class (sublane) axis.
    m = jnp.max(x, axis=0, keepdims=True)                        # (1, TB)
    z = x - m                                                    # (C, TB)
    lse = jnp.log(jnp.sum(jnp.exp(z), axis=0, keepdims=True))    # (1, TB)
    s = jnp.sum(z, axis=0, keepdims=True)                        # (1, TB)

    cls = jax.lax.broadcasted_iota(jnp.int32, (C, TB), 0)
    z_tgt = jnp.sum(jnp.where(cls == tgt, z, 0.0),
                    axis=0, keepdims=True)                       # (1, TB)

    # alpha*CE + (1-alpha)*att per sample, with beta = (1-alpha)*attn[target]:
    #   -[(1-beta)*logp_tgt + beta*sum_c logp_c]
    #   = -[(1-beta)*(z_tgt - lse) + beta*(s - C*lse)]
    per_col = -((1.0 - beta) * (z_tgt - lse) + beta * (s - float(C) * lse))
    per_col = jnp.where(valid, per_col, 0.0)

    out_ref[...] = jnp.sum(per_col, axis=1, keepdims=True)       # (1, 1) partial


def _reference(outputs, targets, *, class_num, alpha=0.6, stimulus_type="12"):
    """Pure-JAX replica of the PyTorch forward, for verification / tiny-B fallback."""
    B, C = outputs.shape
    attn_vec = build_attention_vec(class_num, stimulus_type)
    logp = jax.nn.log_softmax(outputs.astype(jnp.float32), axis=1)
    onehot = jax.nn.one_hot(targets, C, dtype=jnp.float32)
    attn_val = attn_vec[targets][:, None]
    smoothed = jnp.where(onehot > 0, 1.0, attn_val)
    att_loss = -jnp.sum(logp * smoothed) / B
    ce_loss = -jnp.mean(jnp.sum(logp * onehot, axis=1))
    return alpha * ce_loss + (1 - alpha) * att_loss


def celoss_marginal_smooth(outputs, targets, *, class_num, alpha=0.6,
                           stimulus_type="12", max_tile_b=16384,
                           min_pallas_batch=0):
    """outputs: (B, C) float (any dtype), targets: (B,) int -> scalar f32 loss."""
    B, C = outputs.shape
    assert C == class_num

    if B < min_pallas_batch:
        # Tiny batches: launch + grid fixed cost exceeds the work; let XLA fuse
        # it instead (set min_pallas_batch ~2048 to enable this path).
        return _reference(outputs, targets, class_num=class_num, alpha=alpha,
                          stimulus_type=stimulus_type)

    attn_vec = build_attention_vec(class_num, stimulus_type)     # (C,) f32
    tgt_i32 = targets.astype(jnp.int32)
    # (1-alpha) folded into the 12-entry table before the per-sample gather, so
    # the kernel never sees alpha and the aux streams stay at 8 B/sample.
    # NOTE: out-of-range targets clamp here (PyTorch's NLL would raise).
    beta_tbl = (1.0 - float(alpha)) * attn_vec
    beta = beta_tbl[tgt_i32].reshape(1, B)                       # (1, B) f32
    tgt_2d = tgt_i32.reshape(1, B)                               # (1, B) i32

    if B <= max_tile_b:
        tile_b, num_tiles = B, 1
    else:
        # Lane-dim blocks must be multiples of 128; the big default (16K) keeps
        # per-step DMA in the MiB range so step overhead is amortized.
        tile_b = max(128, (min(max_tile_b, B) // 128) * 128)
        num_tiles = pl.cdiv(B, tile_b)

    kernel = functools.partial(_celoss_marginal_smooth_kernel,
                               batch=B, tile_b=tile_b)

    cost = pl.CostEstimate(
        flops=8 * B * C,
        transcendentals=B * (C + 1),
        bytes_accessed=B * C * outputs.dtype.itemsize + 8 * B + 4 * num_tiles,
    )

    partials = pl.pallas_call(
        kernel,
        out_shape=jax.ShapeDtypeStruct((num_tiles, 1), jnp.float32),
        grid_spec=pltpu.PrefetchScalarGridSpec(
            num_scalar_prefetch=0,
            grid=(num_tiles,),
            in_specs=[
                pl.BlockSpec((tile_b, C), lambda t: (t, 0)),   # logits, natural layout
                pl.BlockSpec((1, tile_b), lambda t: (0, t)),   # targets
                pl.BlockSpec((1, tile_b), lambda t: (0, t)),   # beta = (1-a)*attn[target]
            ],
            out_specs=pl.BlockSpec((1, 1), lambda t: (t, 0)),  # per-tile partial
        ),
        compiler_params=pltpu.CompilerParams(
            # Independent tiles -> Mosaic may shard this axis across the 2
            # TensorCores on v7x; on v5e/v6e it is a plain serial loop.
            dimension_semantics=("parallel",),
            vmem_limit_bytes=48 * 1024 * 1024,  # v7x-safe (64 MiB physical/TC)
        ),
        cost_estimate=cost,
    )(outputs, tgt_2d, beta)

    # One small XLA reduction over the per-tile partials (better rounding than a
    # long sequential accumulator for very large B), then the 1/B of the spec.
    return jnp.sum(partials) / B


if __name__ == "__main__":
    class_num = 12
    key = jax.random.PRNGKey(0)

    def check(batch, max_tile_b):
        k_out, k_tgt = jax.random.split(jax.random.fold_in(key, batch))
        outputs = jax.random.normal(k_out, (batch, class_num), dtype=jnp.float32)
        targets = jax.random.randint(k_tgt, (batch,), 0, class_num, dtype=jnp.int32)
        loss = celoss_marginal_smooth(outputs, targets, class_num=class_num,
                                      alpha=0.6, stimulus_type="12",
                                      max_tile_b=max_tile_b)
        loss = jax.block_until_ready(loss)
        ref = _reference(outputs, targets, class_num=class_num,
                         alpha=0.6, stimulus_type="12")
        assert jnp.allclose(loss, ref, rtol=2e-5, atol=1e-5), (batch, loss, ref)

    check(8, 16384)   # single tile (small demo case)
    check(300, 128)   # 3 tiles, ragged last tile exercises the lane mask
    check(512, 128)   # 4 independent tiles -> parallel axis, per-tile partials
    print("KERNEL_OK")
</pallas_src>

<mosaic_0001>
module attributes {stable_mosaic.version = 11 : i64} {
  func.func @_celoss_marginal_smooth_kernel(%arg0: i32, %arg1: memref<8x12xf32, #tpu.memory_space<vmem>>, %arg2: memref<1x8xi32, #tpu.memory_space<vmem>>, %arg3: memref<1x8xf32, #tpu.memory_space<vmem>>, %arg4: memref<1x1xf32, #tpu.memory_space<vmem>>) attributes {dimension_semantics = [#tpu.dimension_semantics<parallel>], iteration_bounds = array<i64: 1>, scalar_prefetch = 0 : i64, scratch_operands = 0 : i64, tpu.core_type = #tpu.core_type<tc>, window_params = [{transform_indices = @transform_0, window_bounds = array<i64: 8, 12>}, {transform_indices = @transform_1, window_bounds = array<i64: 1, 8>}, {transform_indices = @transform_2, window_bounds = array<i64: 1, 8>}, {transform_indices = @transform_3, window_bounds = array<i64: 1, 1>}]} {
    %c0 = arith.constant 0 : index
    %c0_0 = arith.constant 0 : index
    %0 = vector.load %arg1[%c0, %c0_0] : memref<8x12xf32, #tpu.memory_space<vmem>>, vector<8x12xf32>
    %1 = tpu.transpose %0, [1, 0] : vector<8x12xf32> -> vector<12x8xf32>
    %c0_1 = arith.constant 0 : index
    %c0_2 = arith.constant 0 : index
    %2 = vector.load %arg2[%c0_1, %c0_2] : memref<1x8xi32, #tpu.memory_space<vmem>>, vector<1x8xi32>
    %c0_3 = arith.constant 0 : index
    %c0_4 = arith.constant 0 : index
    %3 = vector.load %arg3[%c0_3, %c0_4] : memref<1x8xf32, #tpu.memory_space<vmem>>, vector<1x8xf32>
    %4 = tpu.iota {dimensions = array<i32: 1>} : vector<1x8xi32>
    %c8_i32 = arith.constant 8 : i32
    %5 = arith.muli %arg0, %c8_i32 : i32
    %6 = vector.broadcast %5 : i32 to vector<1x8xi32>
    %7 = arith.addi %6, %4 : vector<1x8xi32>
    %c8_i32_5 = arith.constant 8 : i32
    %8 = vector.broadcast %c8_i32_5 : i32 to vector<1x8xi32>
    %9 = arith.cmpi slt, %7, %8 : vector<1x8xi32>
    %cst = arith.constant 0.000000e+00 : f32
    %10 = vector.shape_cast %9 : vector<1x8xi1> to vector<1x8xi1>
    %11 = vector.broadcast %10 : vector<1x8xi1> to vector<12x8xi1>
    %12 = vector.broadcast %cst : f32 to vector<12x8xf32>
    %13 = arith.select %11, %1, %12 : vector<12x8xi1>, vector<12x8xf32>
    %cst_6 = arith.constant dense<0xFF800000> : vector<8xf32>
    %14 = vector.multi_reduction <maximumf>, %13, %cst_6 [0] : vector<12x8xf32> to vector<8xf32>
    %15 = vector.shape_cast %14 : vector<8xf32> to vector<1x8xf32>
    %16 = vector.broadcast %15 : vector<1x8xf32> to vector<12x8xf32>
    %17 = arith.subf %13, %16 : vector<12x8xf32>
    %18 = math.exp %17 : vector<12x8xf32>
    %cst_7 = arith.constant dense<0.000000e+00> : vector<8xf32>
    %19 = vector.multi_reduction <add>, %18, %cst_7 [0] : vector<12x8xf32> to vector<8xf32>
    %20 = vector.shape_cast %19 : vector<8xf32> to vector<1x8xf32>
    %21 = math.log %20 : vector<1x8xf32>
    %cst_8 = arith.constant dense<0.000000e+00> : vector<8xf32>
    %22 = vector.multi_reduction <add>, %17, %cst_8 [0] : vector<12x8xf32> to vector<8xf32>
    %23 = vector.shape_cast %22 : vector<8xf32> to vector<1x8xf32>
    %24 = tpu.iota {dimensions = array<i32: 0>} : vector<12x8xi32>
    %25 = vector.broadcast %2 : vector<1x8xi32> to vector<12x8xi32>
    %26 = arith.cmpi eq, %24, %25 : vector<12x8xi32>
    %cst_9 = arith.constant 0.000000e+00 : f32
    %27 = vector.broadcast %cst_9 : f32 to vector<12x8xf32>
    %28 = arith.select %26, %17, %27 : vector<12x8xi1>, vector<12x8xf32>
    %cst_10 = arith.constant dense<0.000000e+00> : vector<8xf32>
    %29 = vector.multi_reduction <add>, %28, %cst_10 [0] : vector<12x8xf32> to vector<8xf32>
    %30 = vector.shape_cast %29 : vector<8xf32> to vector<1x8xf32>
    %cst_11 = arith.constant 1.000000e+00 : f32
    %31 = vector.broadcast %cst_11 : f32 to vector<1x8xf32>
    %32 = arith.subf %31, %3 : vector<1x8xf32>
    %33 = arith.subf %30, %21 : vector<1x8xf32>
    %34 = arith.mulf %32, %33 : vector<1x8xf32>
    %cst_12 = arith.constant 1.200000e+01 : f32
    %35 = vector.broadcast %cst_12 : f32 to vector<1x8xf32>
    %36 = arith.mulf %35, %21 : vector<1x8xf32>
    %37 = arith.subf %23, %36 : vector<1x8xf32>
    %38 = arith.mulf %3, %37 : vector<1x8xf32>
    %39 = arith.addf %34, %38 : vector<1x8xf32>
    %cst_13 = arith.constant 0.000000e+00 : f32
    %40 = vector.broadcast %cst_13 : f32 to vector<1x8xf32>
    %41 = arith.subf %40, %39 : vector<1x8xf32>
    %cst_14 = arith.constant 0.000000e+00 : f32
    %42 = vector.broadcast %cst_14 : f32 to vector<1x8xf32>
    %43 = arith.select %9, %41, %42 : vector<1x8xi1>, vector<1x8xf32>
    %cst_15 = arith.constant dense<0.000000e+00> : vector<1xf32>
    %44 = vector.multi_reduction <add>, %43, %cst_15 [1] : vector<1x8xf32> to vector<1xf32>
    %45 = vector.shape_cast %44 : vector<1xf32> to vector<1x1xf32>
    %c0_16 = arith.constant 0 : index
    %c0_17 = arith.constant 0 : index
    %46 = vector.load %arg4[%c0_16, %c0_17] : memref<1x1xf32, #tpu.memory_space<vmem>>, vector<1x1xf32>
    tpu.vector_store %arg4[%c0_16, %c0_17], %45 {strides = array<i32>} : memref<1x1xf32, #tpu.memory_space<vmem>>, vector<1x1xf32>,
    return
  }
  func.func @transform_0(%arg0: i32) -> (i32, i32) {
    %c0_i32 = arith.constant 0 : i32
    %c0_i32_0 = arith.constant 0 : i32
    return %arg0, %c0_i32 : i32, i32
  }
  func.func @transform_1(%arg0: i32) -> (i32, i32) {
    %c0_i32 = arith.constant 0 : i32
    %c0_i32_0 = arith.constant 0 : i32
    return %c0_i32, %arg0 : i32, i32
  }
  func.func @transform_2(%arg0: i32) -> (i32, i32) {
    %c0_i32 = arith.constant 0 : i32
    %c0_i32_0 = arith.constant 0 : i32
    return %c0_i32, %arg0 : i32, i32
  }
  func.func @transform_3(%arg0: i32) -> (i32, i32) {
    %c0_i32 = arith.constant 0 : i32
    %c0_i32_0 = arith.constant 0 : i32
    return %arg0, %c0_i32 : i32, i32
  }
}

</mosaic_0001>

<llo_original>
// kernel: tpu_custom_call.1
$region0: #{tpu_custom_call.1}
  #allocation0 [shape = 'u32[]', space=smem, size = 0x4, offset = 0x4, fixed_abs, tag = 'smem constant byte address 0x4 - core index']
  #allocation1 [shape = 'u32[144,128]{1,0:T(1,128)}', space=vmem, size = 0x12000, scoped, tag = 'internal scratch']
  %s0 = inlined_call_operand.hbm [shape: f32[8,12], index: 0, kind: input, shape index: {}]
  %s1 = inlined_call_operand.vmem [shape: s32[1,8], index: 1, kind: input, shape index: {}]
  %s2 = inlined_call_operand.vmem [shape: f32[1,8], index: 2, kind: input, shape index: {}]
  %s3 = inlined_call_operand.hbm [shape: f32[1,1], index: 3, kind: output, shape index: {}]
  %s4 = sld [smem:[#allocation0]]
  $region26: #{tpu_custom_call.1} parent=0
    _
  %s6 = ssub.s32 1, %s4
  %s7 = scalar_select 0, %s6, %s4
  $region1: #{tpu_custom_call.1} parent=0
    #allocation2 [shape = 'u8[4096]{0}', space=vmem, size = 0x1000, scoped, tag = 'input window, operand 0, single buffered']
    #allocation3 [shape = 's32[1]{0}', space=sflag, size = 0x4, scoped, tag = 'scoped memory for tpu_custom_call.1']
    #allocation4 [shape = 's32[1]{0}', space=sflag, size = 0x4, scoped, tag = 'scoped memory for tpu_custom_call.1']
    #allocation5 [shape = 'u8[512]{0}', space=vmem, size = 0x400, scoped, tag = 'output window, operand 0, single buffered']
    %8 = vsyncpa [#allocation3], 0
    %9 = vsyncpa [#allocation4], 0
    // Predicated region
    $region2: #{tpu_custom_call.1} parent=1 // pred_check
      _
    $region3: #{tpu_custom_call.1} parent=1 // pred_check_branch
      %11 = sbr.rel (0) target = $region5
    $region4: #{tpu_custom_call.1} parent=1 // pred_region
      %s13 = ssub.s32 128, 128
      %14 = vsyncadd [#allocation3], %s13
      %s16 = sshll.u32 [#allocation2], 4
      %s17 = int_to_ptr.vmem [resolvable:$true] %s16
      %19 = dma.hbm_to_vmem [thread:$0]  %s0, 128, %s17, [#allocation3]
    $region5: #{tpu_custom_call.1} parent=1 // pred_fallthru
      _
    // Predicated region
    $region6: #{tpu_custom_call.1} parent=1 // pred_check
      _
    $region7: #{tpu_custom_call.1} parent=1 // pred_check_branch
      %21 = sbr.rel (0) target = $region9
    $region8: #{tpu_custom_call.1} parent=1 // pred_region
      _
    $region9: #{tpu_custom_call.1} parent=1 // pred_fallthru
      _
    // Predicated region
    $region10: #{tpu_custom_call.1} parent=1 // pred_check
      _
    $region11: #{tpu_custom_call.1} parent=1 // pred_check_branch
      %23 = sbr.rel (0) target = $region13
    $region12: #{tpu_custom_call.1} parent=1 // pred_region
      _
    $region13: #{tpu_custom_call.1} parent=1 // pred_fallthru
      _
    // Predicated region
    $region14: #{tpu_custom_call.1} parent=1 // pred_check
      _
    $region15: #{tpu_custom_call.1} parent=1 // pred_check_branch
      %25 = sbr.rel (0) target = $region17
    $region16: #{tpu_custom_call.1} parent=1 // pred_region
      %26 = dma.done [#allocation3], 128
    $region17: #{tpu_custom_call.1} parent=1 // pred_fallthru
      _
    %v27 = vld [vmem:[#allocation2] sm:$0xff]
    %28 = vxpose.xlu0.b32.start [1/16] %v27, 128
    %29 = vxpose.xlu0.b32.cont [2/16] 0.0, 128
    %30 = vxpose.xlu0.b32.cont [3/16] 0.0, 128
    %31 = vxpose.xlu0.b32.cont [4/16] 0.0, 128
    %32 = vxpose.xlu0.b32.cont [5/16] 0.0, 128
    %33 = vxpose.xlu0.b32.cont [6/16] 0.0, 128
    %34 = vxpose.xlu0.b32.cont [7/16] 0.0, 128
    %35 = vxpose.xlu0.b32.cont [8/16] 0.0, 128
    %36 = vxpose.xlu0.b32.cont [9/16] 0.0, 128
    %37 = vxpose.xlu0.b32.cont [10/16] 0.0, 128
    %38 = vxpose.xlu0.b32.cont [11/16] 0.0, 128
    %39 = vxpose.xlu0.b32.cont [12/16] 0.0, 128
    %40 = vxpose.xlu0.b32.cont [13/16] 0.0, 128
    %41 = vxpose.xlu0.b32.cont [14/16] 0.0, 128
    %42 = vxpose.xlu0.b32.cont [15/16] 0.0, 128
    %43 = vxpose.xlu0.b32.end [16/16] 0.0, 128
    %v44 = vpop.trf.xlu0
    %v45 = vpop.trf.xlu0
    %v46 = vpop.trf.xlu0
    %v47 = vpop.trf.xlu0
    %v48 = vpop.trf.xlu0
    %v49 = vpop.trf.xlu0
    %v50 = vpop.trf.xlu0
    %v51 = vpop.trf.xlu0
    %v52 = vpop.trf.xlu0
    %v53 = vpop.trf.xlu0
    %v54 = vpop.trf.xlu0
    %v55 = vpop.trf.xlu0
    %v56 = vpop.trf.xlu0
    %v57 = vpop.trf.xlu0
    %v58 = vpop.trf.xlu0
    %v59 = vpop.trf.xlu0
    %v60 = vld [vmem:[%s1] sm:$0x1]
    %v61 = vld [vmem:[%s2] sm:$0x1]
    %v62 = vlaneseq
    %v63 = vand.u32 %v62, 127
    %s64 = smul.u32 0, 8
    %v65 = vstv %s64
    %v66 = vadd.s32 %v65, %v63
    %vm67 = vcmp.lt.s32.totalorder %v66, 8
    %v68 = vsel %vm67, 1, 0
    %vm69 = vcmp.eq.s32.totalorder %v68, 1
    %v70 = vsel %vm69, %v44, 0.0
    %v71 = vsel %vm69, %v45, 0.0
    %vm72 = vcmask 64512
    %v73 = vsel %vm72, %v70, -inf
    %vm74 = vcmask 60416
    %v75 = vsel %vm74, %v71, -inf
    %v76 = vmax.f32 %v73, %v75
    %v77 = vrot.slane %v76, 4
    %v78 = vmax.f32 %v76, %v77
    %v79 = vrot.slane %v78, 2
    %v80 = vmax.f32 %v78, %v79
    %v81 = vrot.slane %v80, 1
    %v82 = vmax.f32 %v80, %v81
    %v83 = vsub.f32 %v70, %v82
    %v84 = vsub.f32 %v71, %v82
    %v85 = vmul.f32 %v83, 1.442695
    %v86 = vpow.pop %v85
    %v87 = vmul.f32 %v84, 1.442695
    %v88 = vpow.pop %v87
    %v89 = vsel %vm72, %v86, 0.0
    %v90 = vsel %vm74, %v88, 0.0
    %v91 = vadd.f32 %v89, %v90
    %v92 = vrot.slane %v91, 4
    %v93 = vadd.f32 %v91, %v92
    %v94 = vrot.slane %v93, 2
    %v95 = vadd.f32 %v93, %v94
    %v96 = vrot.slane %v95, 1
    %v97 = vadd.f32 %v95, %v96
    %v98 = vlog2.pop %v97
    %v99 = vmul.f32 %v98, 0.6931472
    %v100 = vsel %vm72, %v83, 0.0
    %v101 = vsel %vm74, %v84, 0.0
    %v102 = vadd.f32 %v100, %v101
    %v103 = vrot.slane %v102, 4
    %v104 = vadd.f32 %v102, %v103
    %v105 = vrot.slane %v104, 2
    %v106 = vadd.f32 %v104, %v105
    %v107 = vrot.slane %v106, 1
    %v108 = vadd.f32 %v106, %v107
    %v109 = vlaneseq
    %v110 = vshrl.u32 %v109, 7
    %v111 = vadd.s32 %v110, 8
    %v112 = vlaneseq
    %v113 = vshrl.u32 %v112, 7
    %v114 = vsub.s32 0, %v113
    %v115 = vrot.slane %v60, %v114
    %vm116 = vcmp.eq.s32.totalorder %v110, %v115
    %vm117 = vcmp.eq.s32.totalorder %v111, %v115
    %v118 = vsel %vm116, %v83, 0.0
    %v119 = vsel %vm117, %v84, 0.0
    %v120 = vsel %vm72, %v118, 0.0
    %v121 = vsel %vm74, %v119, 0.0
    %v122 = vadd.f32 %v120, %v121
    %v123 = vrot.slane %v122, 4
    %v124 = vadd.f32 %v122, %v123
    %v125 = vrot.slane %v124, 2
    %v126 = vadd.f32 %v124, %v125
    %v127 = vrot.slane %v126, 1
    %v128 = vadd.f32 %v126, %v127
    %v129 = vsub.f32 1.0, %v61
    %v130 = vsub.f32 %v128, %v99
    %v131 = vmul.f32 %v129, %v130
    %v132 = vmul.f32 %v99, 12.0
    %v133 = vsub.f32 %v108, %v132
    %v134 = vmul.f32 %v61, %v133
    %v135 = vadd.f32 %v131, %v134
    %v136 = vsub.f32 0.0, %v135
    %v137 = vsel %vm67, %v136, 0.0
    %vm138 = vcmask 57344
    %v139 = vsel %vm138, %v137, 0.0
    %140 = vadd.xlane.f32.xlu0 %v139
    %v141 = vpop.xlane.xlu0 %140
    %vm142 = vcmask 0
    %143 = vst.msk [vmem:[#allocation5] sm:$0x1] %vm142, %v141
    // Predicated region
    $region18: #{tpu_custom_call.1} parent=1 // pred_check
      _
    $region19: #{tpu_custom_call.1} parent=1 // pred_check_branch
      %145 = sbr.rel (0) target = $region21
    $region20: #{tpu_custom_call.1} parent=1 // pred_region
      %s147 = ssub.s32 16, 16
      %148 = vsyncadd [#allocation4], %s147
      %s150 = sshll.u32 [#allocation5], 4
      %s151 = int_to_ptr.vmem [resolvable:$true] %s150
      %153 = dma.vmem_to_hbm [thread:$0]  %s151, 16, %s3, [#allocation4]
    $region21: #{tpu_custom_call.1} parent=1 // pred_fallthru
      _
    // Predicated region
    $region22: #{tpu_custom_call.1} parent=1 // pred_check
      _
    $region23: #{tpu_custom_call.1} parent=1 // pred_check_branch
      %155 = sbr.rel (0) target = $region25
    $region24: #{tpu_custom_call.1} parent=1 // pred_region
      %156 = dma.done [#allocation4], 16
    $region25: #{tpu_custom_call.1} parent=1 // pred_fallthru
      _
    %157 = vsyncpa [#allocation3], 1
    %158 = vsyncpa [#allocation4], 1

</llo_original>
